<compile_context>
chip_gen: v5e
topology: v5e:2x2
jax: 0.10.0
libtpu: 0.0.40
codegen_flags: <defaults>
</compile_context>

<pallas_src>
import functools

import jax
import jax.numpy as jnp
from jax.experimental import pallas as pl
from jax.experimental.pallas import tpu as pltpu

_LANE = 128
_SUBLANE = 8
_VMEM_TILE_BUDGET = 20 * 1024 * 1024   # conservative: fits v7x's smaller VMEM
_VMEM_LIMIT_BYTES = 32 * 1024 * 1024   # raise v5e's 16 MiB default scoped limit
_CLASS_MAJOR_MAX_C = 32                # emit class-major outputs when C is tiny
_MAX_BATCH_TILE = 1024


def _round_up(n: int, m: int) -> int:
    return ((n + m - 1) // m) * m


def _linear_softmax_kernel(x_ref, w_ref, b_ref, logits_ref, prob_ref, *,
                           class_major):
    # x_ref: [TB, D]; w_ref: [D, Cpad] (pre-transposed, VMEM-resident);
    # b_ref: [1, Cpad] f32 with -FLT_MAX on padded classes.
    logits = jnp.dot(x_ref[...], w_ref[...],
                     preferred_element_type=jnp.float32) + b_ref[...]

    if class_major:
        # Small C: write class-major [C8, TB] so HBM writeback is lane-dense
        # over the batch and only ~C rows wide (instead of a 128-wide slab).
        c_out = logits_ref.shape[0]
        lt = logits.T                                  # [Cpad, TB]; XLU slot
        m = jnp.max(lt, axis=0, keepdims=True)         # padded rows ~ -FLT_MAX
        e = jnp.exp(lt[:c_out, :] - m)                 # exp only on real rows
        denom = jnp.sum(e, axis=0, keepdims=True)
        inv = pl.reciprocal(denom, approx=True)        # EUP slot (~free)
        inv = inv * (2.0 - denom * inv)                # Newton step -> ~f32 exact
        logits_ref[...] = lt[:c_out, :].astype(logits_ref.dtype)
        prob_ref[...] = (e * inv).astype(prob_ref.dtype)
    else:
        m = jnp.max(logits, axis=-1, keepdims=True)
        e = jnp.exp(logits - m)                        # padded cols -> exp == 0
        denom = jnp.sum(e, axis=-1, keepdims=True)
        inv = pl.reciprocal(denom, approx=True)
        inv = inv * (2.0 - denom * inv)
        logits_ref[...] = logits.astype(logits_ref.dtype)
        prob_ref[...] = (e * inv).astype(prob_ref.dtype)


def _pick_batch_tile(D: int, c_pad: int, out_cols: int, itemsize: int) -> int:
    """Largest batch tile (multiple of 128, <=1024) fitting the VMEM budget."""
    resident = c_pad * D * itemsize + c_pad * 4        # single-buffered W + bias
    per_row = 2 * D * itemsize + 2 * 2 * out_cols * 4  # x dbl-buf + 2 f32 outs dbl-buf
    tb = (_VMEM_TILE_BUDGET - resident) // max(per_row, 1)
    tb = int(max(_LANE, min(_MAX_BATCH_TILE, tb)))
    return (tb // _LANE) * _LANE


@jax.jit
def simple_linear_classifier(x, weight, bias):
    """Forward pass of SimpleLinearClassifier.

    x:      [B, D]
    weight: [C, D]  (torch.nn.Linear layout)
    bias:   [C]
    Returns (logits [B, C] f32, probabilities [B, C] f32), matching
    torch.nn.functional.softmax(linear(x), dim=1).
    """
    B, D = x.shape
    C, D2 = weight.shape
    assert D == D2 and bias.shape == (C,)

    class_major = C <= _CLASS_MAJOR_MAX_C
    c_pad = _round_up(max(C, _LANE), _LANE)   # lane-dense class dim for MXU/softmax
    c8 = _round_up(C, _SUBLANE)               # class-major output rows

    # One-time tiny parameter prep (weight pre-transposed; no per-call x copy).
    w_t = jnp.zeros((D, c_pad), dtype=x.dtype)
    w_t = w_t.at[:, :C].set(weight.T.astype(x.dtype))
    neg_big = jnp.finfo(jnp.float32).min      # acts as -inf for padded classes
    b_p = jnp.full((1, c_pad), neg_big, dtype=jnp.float32)
    b_p = b_p.at[0, :C].set(bias.astype(jnp.float32))

    out_cols = c8 if class_major else c_pad
    tb_cap = _pick_batch_tile(D, c_pad, out_cols, x.dtype.itemsize)
    if B <= tb_cap:
        tb = B                                # single tile == full (small) batch
        grid = (1,)
    else:
        tb = tb_cap                           # multiple of 128 (and 8)
        grid = (pl.cdiv(B, tb),)              # ragged last tile handled by Pallas

    if class_major:
        out_shape = (jax.ShapeDtypeStruct((c8, B), jnp.float32),
                     jax.ShapeDtypeStruct((c8, B), jnp.float32))
        out_specs = (pl.BlockSpec((c8, tb), lambda i: (0, i)),
                     pl.BlockSpec((c8, tb), lambda i: (0, i)))
    else:
        out_shape = (jax.ShapeDtypeStruct((B, c_pad), jnp.float32),
                     jax.ShapeDtypeStruct((B, c_pad), jnp.float32))
        out_specs = (pl.BlockSpec((tb, c_pad), lambda i: (i, 0)),
                     pl.BlockSpec((tb, c_pad), lambda i: (i, 0)))

    kernel = functools.partial(_linear_softmax_kernel, class_major=class_major)

    logits_p, probs_p = pl.pallas_call(
        kernel,
        out_shape=out_shape,
        grid=grid,
        in_specs=[
            # x tile: streamed, double-buffered by default.
            pl.BlockSpec((tb, D), lambda i: (i, 0)),
            # Resident weight / bias: constant index map, single-buffered.
            pl.BlockSpec((D, c_pad), lambda i: (0, 0),
                         pipeline_mode=pl.Buffered(1)),
            pl.BlockSpec((1, c_pad), lambda i: (0, 0),
                         pipeline_mode=pl.Buffered(1)),
        ],
        out_specs=out_specs,
        compiler_params=pltpu.CompilerParams(
            dimension_semantics=("parallel",),
            vmem_limit_bytes=_VMEM_LIMIT_BYTES,
        ),
    )(x, w_t, b_p)

    if class_major:
        # Tiny [C8, B] results: slice + transpose back to [B, C] (cheap).
        return logits_p[:C, :].T, probs_p[:C, :].T
    return logits_p[:, :C], probs_p[:, :C]


if __name__ == "__main__":
    batch, input_dim, num_class = 8, 32, 8

    key = jax.random.PRNGKey(0)
    kx, kw, kb = jax.random.split(key, 3)

    x = jax.random.normal(kx, (batch, input_dim), dtype=jnp.float32)
    # Deterministic parameter init (mimics torch.nn.Linear uniform init scale).
    bound = 1.0 / (input_dim ** 0.5)
    weight = jax.random.uniform(kw, (num_class, input_dim),
                                minval=-bound, maxval=bound, dtype=jnp.float32)
    bias = jax.random.uniform(kb, (num_class,),
                              minval=-bound, maxval=bound, dtype=jnp.float32)

    logits, probs = simple_linear_classifier(x, weight, bias)
    jax.block_until_ready((logits, probs))

    # Sanity-check against pure-JAX reference.
    ref_logits = x @ weight.T + bias
    ref_probs = jax.nn.softmax(ref_logits, axis=1)
    assert logits.shape == (batch, num_class)
    assert probs.shape == (batch, num_class)
    assert jnp.allclose(logits, ref_logits, atol=1e-5, rtol=1e-5)
    assert jnp.allclose(probs, ref_probs, atol=1e-5, rtol=1e-5)
    assert jnp.allclose(jnp.sum(probs, axis=1), 1.0, atol=1e-5)

    print("KERNEL_OK")
</pallas_src>

<mosaic_0001>
module attributes {stable_mosaic.version = 11 : i64} {
  func.func @_linear_softmax_kernel(%arg0: i32, %arg1: memref<8x32xf32, #tpu.memory_space<vmem>>, %arg2: memref<32x128xf32, #tpu.memory_space<vmem>>, %arg3: memref<1x128xf32, #tpu.memory_space<vmem>>, %arg4: memref<8x8xf32, #tpu.memory_space<vmem>>, %arg5: memref<8x8xf32, #tpu.memory_space<vmem>>) attributes {dimension_semantics = [#tpu.dimension_semantics<parallel>], iteration_bounds = array<i64: 1>, scalar_prefetch = 0 : i64, scratch_operands = 0 : i64, tpu.core_type = #tpu.core_type<tc>, window_params = [{transform_indices = @transform_0, window_bounds = array<i64: 8, 32>}, {pipeline_mode = #tpu.pipeline_mode<synchronous>, transform_indices = @transform_1, window_bounds = array<i64: 32, 128>}, {pipeline_mode = #tpu.pipeline_mode<synchronous>, transform_indices = @transform_2, window_bounds = array<i64: 1, 128>}, {transform_indices = @transform_3, window_bounds = array<i64: 8, 8>}, {transform_indices = @transform_4, window_bounds = array<i64: 8, 8>}]} {
    %c0 = arith.constant 0 : index
    %c0_0 = arith.constant 0 : index
    %0 = vector.load %arg1[%c0, %c0_0] : memref<8x32xf32, #tpu.memory_space<vmem>>, vector<8x32xf32>
    %c0_1 = arith.constant 0 : index
    %c0_2 = arith.constant 0 : index
    %1 = vector.load %arg2[%c0_1, %c0_2] : memref<32x128xf32, #tpu.memory_space<vmem>>, vector<32x128xf32>
    %cst = arith.constant dense<0.000000e+00> : vector<8x128xf32>
    %2 = tpu.matmul %0, %1, %cst {dimension_numbers = #tpu.dot_dimension_numbers<[1], [0], [0], [1], [0, 0, 1, 1], [], []>} : vector<8x32xf32>, vector<32x128xf32>, vector<8x128xf32> -> vector<8x128xf32>
    %c0_3 = arith.constant 0 : index
    %c0_4 = arith.constant 0 : index
    %3 = vector.load %arg3[%c0_3, %c0_4] : memref<1x128xf32, #tpu.memory_space<vmem>>, vector<1x128xf32>
    %4 = vector.broadcast %3 : vector<1x128xf32> to vector<8x128xf32>
    %5 = arith.addf %2, %4 : vector<8x128xf32>
    %6 = tpu.transpose %5, [1, 0] : vector<8x128xf32> -> vector<128x8xf32>
    %cst_5 = arith.constant dense<0xFF800000> : vector<8xf32>
    %7 = vector.multi_reduction <maximumf>, %6, %cst_5 [0] : vector<128x8xf32> to vector<8xf32>
    %8 = vector.shape_cast %7 : vector<8xf32> to vector<1x8xf32>
    %9 = vector.extract_strided_slice %6 {offsets = [0, 0], sizes = [8, 8], strides = [1, 1]} : vector<128x8xf32> to vector<8x8xf32>
    %10 = vector.broadcast %8 : vector<1x8xf32> to vector<8x8xf32>
    %11 = arith.subf %9, %10 : vector<8x8xf32>
    %12 = math.exp %11 : vector<8x8xf32>
    %cst_6 = arith.constant dense<0.000000e+00> : vector<8xf32>
    %13 = vector.multi_reduction <add>, %12, %cst_6 [0] : vector<8x8xf32> to vector<8xf32>
    %14 = vector.shape_cast %13 : vector<8xf32> to vector<1x8xf32>
    %15 = tpu.reciprocal %14 {approx = true} : vector<1x8xf32> -> vector<1x8xf32>
    %16 = arith.mulf %14, %15 : vector<1x8xf32>
    %cst_7 = arith.constant 2.000000e+00 : f32
    %17 = vector.broadcast %cst_7 : f32 to vector<1x8xf32>
    %18 = arith.subf %17, %16 : vector<1x8xf32>
    %19 = arith.mulf %15, %18 : vector<1x8xf32>
    %20 = vector.extract_strided_slice %6 {offsets = [0, 0], sizes = [8, 8], strides = [1, 1]} : vector<128x8xf32> to vector<8x8xf32>
    %c0_8 = arith.constant 0 : index
    %c0_9 = arith.constant 0 : index
    %21 = vector.load %arg4[%c0_8, %c0_9] : memref<8x8xf32, #tpu.memory_space<vmem>>, vector<8x8xf32>
    tpu.vector_store %arg4[%c0_8, %c0_9], %20 {strides = array<i32>} : memref<8x8xf32, #tpu.memory_space<vmem>>, vector<8x8xf32>,
    %22 = vector.broadcast %19 : vector<1x8xf32> to vector<8x8xf32>
    %23 = arith.mulf %12, %22 : vector<8x8xf32>
    %c0_10 = arith.constant 0 : index
    %c0_11 = arith.constant 0 : index
    %24 = vector.load %arg5[%c0_10, %c0_11] : memref<8x8xf32, #tpu.memory_space<vmem>>, vector<8x8xf32>
    tpu.vector_store %arg5[%c0_10, %c0_11], %23 {strides = array<i32>} : memref<8x8xf32, #tpu.memory_space<vmem>>, vector<8x8xf32>,
    return
  }
  func.func @transform_0(%arg0: i32) -> (i32, i32) {
    %c0_i32 = arith.constant 0 : i32
    %c0_i32_0 = arith.constant 0 : i32
    return %arg0, %c0_i32 : i32, i32
  }
  func.func @transform_1(%arg0: i32) -> (i32, i32) {
    %c0_i32 = arith.constant 0 : i32
    %c0_i32_0 = arith.constant 0 : i32
    %c0_i32_1 = arith.constant 0 : i32
    return %c0_i32, %c0_i32_0 : i32, i32
  }
  func.func @transform_2(%arg0: i32) -> (i32, i32) {
    %c0_i32 = arith.constant 0 : i32
    %c0_i32_0 = arith.constant 0 : i32
    %c0_i32_1 = arith.constant 0 : i32
    return %c0_i32, %c0_i32_0 : i32, i32
  }
  func.func @transform_3(%arg0: i32) -> (i32, i32) {
    %c0_i32 = arith.constant 0 : i32
    %c0_i32_0 = arith.constant 0 : i32
    return %c0_i32, %arg0 : i32, i32
  }
  func.func @transform_4(%arg0: i32) -> (i32, i32) {
    %c0_i32 = arith.constant 0 : i32
    %c0_i32_0 = arith.constant 0 : i32
    return %c0_i32, %arg0 : i32, i32
  }
}

</mosaic_0001>

<llo_original>
// kernel: simple_linear_classifier.1
$region0: #{simple_linear_classifier.1}
  #allocation0 [shape = 'u32[]', space=smem, size = 0x4, offset = 0x4, fixed_abs, tag = 'smem constant byte address 0x4 - core index']
  #allocation1 [shape = 'u32[72,128]{1,0:T(1,128)}', space=vmem, size = 0x9000, scoped, tag = 'internal scratch']
  %s0 = inlined_call_operand.vmem [shape: f32[8,32], index: 0, kind: input, shape index: {}]
  %s1 = inlined_call_operand.vmem [shape: f32[32,128], index: 1, kind: input, shape index: {}]
  %s2 = inlined_call_operand.vmem [shape: f32[1,128], index: 2, kind: input, shape index: {}]
  %s3 = inlined_call_operand.vmem [shape: f32[8,8], index: 3, kind: output, shape index: {0}]
  %s4 = inlined_call_operand.vmem [shape: f32[8,8], index: 4, kind: output, shape index: {1}]
  %5 = xla_tuple %s3, %s4
  %s6 = sld [smem:[#allocation0]]
  $region30: #{simple_linear_classifier.1} parent=0
    _
  %s8 = ssub.s32 1, %s6
  %s9 = scalar_select 0, %s8, %s6
  // Predicated region
  $region2: #{simple_linear_classifier.1} parent=0 // pred_check
    _
  $region3: #{simple_linear_classifier.1} parent=0 // pred_check_branch
    %11 = sbr.rel (0) target = $region5
  $region4: #{simple_linear_classifier.1} parent=0 // pred_region
    _
  $region5: #{simple_linear_classifier.1} parent=0 // pred_fallthru
    _
  // Predicated region
  $region6: #{simple_linear_classifier.1} parent=0 // pred_check
    _
  $region7: #{simple_linear_classifier.1} parent=0 // pred_check_branch
    %13 = sbr.rel (0) target = $region9
  $region8: #{simple_linear_classifier.1} parent=0 // pred_region
    _
  $region9: #{simple_linear_classifier.1} parent=0 // pred_fallthru
    _
  // Predicated region
  $region10: #{simple_linear_classifier.1} parent=0 // pred_check
    _
  $region11: #{simple_linear_classifier.1} parent=0 // pred_check_branch
    %15 = sbr.rel (0) target = $region13
  $region12: #{simple_linear_classifier.1} parent=0 // pred_region
    _
  $region13: #{simple_linear_classifier.1} parent=0 // pred_fallthru
    _
  %v16 = vld [vmem:[%s0] sm:$0xff]
  %v17 = vld [vmem:[%s1] sm:$0xff]
  %v18 = vld [vmem:[%s1 + $0x8] sm:$0xff]
  %v19 = vld [vmem:[%s1 + $0x10] sm:$0xff]
  %v20 = vld [vmem:[%s1 + $0x18] sm:$0xff]
  %v21 = vld [vmem:[%s2] sm:$0x1]
  %v23 = vperm.slane %v21, 0
  %vm25 = vcmask 261120
  %v27 = vsel %vm25, %v16, 0
  %29 = vmatpush.msra.mxu0 0.0
  %30 = vmatpush.msra.mxu0 0.0
  %31 = vmatpush.msra.mxu0 0.0
  %32 = vmatpush.msra.mxu0 0.0
  %33 = vmatpush.msra.mxu0 0.0
  %34 = vmatpush.msra.mxu0 0.0
  %35 = vmatpush.msra.mxu0 0.0
  %36 = vmatpush.msra.mxu0 0.0
  %37 = vmatpush.msra.mxu0 0.0
  %38 = vmatpush.msra.mxu0 0.0
  %39 = vmatpush.msra.mxu0 0.0
  %40 = vmatpush.msra.mxu0 0.0
  %41 = vmatpush.msra.mxu0 %v20
  %42 = vmatpush.msra.mxu0 %v19
  %43 = vmatpush.msra.mxu0 %v18
  %44 = vmatpush.msra.mxu0 %v17
  %45 = vmatmul.f32.gmra.mxu0 %v27
  %v46 = vpop.f32.mrf.mxu0
  %v47 = vadd.f32 %v23, %v46
  %48 = vdwg.mxu0
  %49 = vxpose.xlu0.b32.start [1/16] %v47, 128
  %50 = vxpose.xlu0.b32.cont [2/16] 0.0, 128
  %51 = vxpose.xlu0.b32.cont [3/16] 0.0, 128
  %52 = vxpose.xlu0.b32.cont [4/16] 0.0, 128
  %53 = vxpose.xlu0.b32.cont [5/16] 0.0, 128
  %54 = vxpose.xlu0.b32.cont [6/16] 0.0, 128
  %55 = vxpose.xlu0.b32.cont [7/16] 0.0, 128
  %56 = vxpose.xlu0.b32.cont [8/16] 0.0, 128
  %57 = vxpose.xlu0.b32.cont [9/16] 0.0, 128
  %58 = vxpose.xlu0.b32.cont [10/16] 0.0, 128
  %59 = vxpose.xlu0.b32.cont [11/16] 0.0, 128
  %60 = vxpose.xlu0.b32.cont [12/16] 0.0, 128
  %61 = vxpose.xlu0.b32.cont [13/16] 0.0, 128
  %62 = vxpose.xlu0.b32.cont [14/16] 0.0, 128
  %63 = vxpose.xlu0.b32.cont [15/16] 0.0, 128
  %64 = vxpose.xlu0.b32.end [16/16] 0.0, 128
  %v65 = vpop.trf.xlu0
  %v66 = vpop.trf.xlu0
  %v67 = vpop.trf.xlu0
  %v68 = vpop.trf.xlu0
  %v69 = vpop.trf.xlu0
  %v70 = vpop.trf.xlu0
  %v71 = vpop.trf.xlu0
  %v72 = vpop.trf.xlu0
  %v73 = vpop.trf.xlu0
  %v74 = vpop.trf.xlu0
  %v75 = vpop.trf.xlu0
  %v76 = vpop.trf.xlu0
  %v77 = vpop.trf.xlu0
  %v78 = vpop.trf.xlu0
  %v79 = vpop.trf.xlu0
  %v80 = vpop.trf.xlu0
  %vm81 = vcmask 64512
  %v82 = vsel %vm81, %v65, -inf
  %v83 = vsel %vm81, %v66, -inf
  %v84 = vsel %vm81, %v67, -inf
  %v85 = vsel %vm81, %v68, -inf
  %v86 = vsel %vm81, %v69, -inf
  %v87 = vmax.f32 %v82, %v86
  %v88 = vsel %vm81, %v70, -inf
  %v89 = vmax.f32 %v83, %v88
  %v90 = vsel %vm81, %v71, -inf
  %v91 = vmax.f32 %v84, %v90
  %v92 = vsel %vm81, %v72, -inf
  %v93 = vmax.f32 %v85, %v92
  %v94 = vsel %vm81, %v73, -inf
  %v95 = vmax.f32 %v87, %v94
  %v96 = vsel %vm81, %v74, -inf
  %v97 = vmax.f32 %v89, %v96
  %v98 = vsel %vm81, %v75, -inf
  %v99 = vmax.f32 %v91, %v98
  %v100 = vsel %vm81, %v76, -inf
  %v101 = vmax.f32 %v93, %v100
  %v102 = vsel %vm81, %v77, -inf
  %v103 = vmax.f32 %v95, %v102
  %v104 = vsel %vm81, %v78, -inf
  %v105 = vmax.f32 %v97, %v104
  %v106 = vsel %vm81, %v79, -inf
  %v107 = vmax.f32 %v99, %v106
  %v108 = vsel %vm81, %v80, -inf
  %v109 = vmax.f32 %v101, %v108
  %v110 = vmax.f32 %v103, %v105
  %v111 = vmax.f32 %v107, %v109
  %v112 = vmax.f32 %v110, %v111
  %v113 = vrot.slane %v112, 4
  %v114 = vmax.f32 %v112, %v113
  %v115 = vrot.slane %v114, 2
  %v116 = vmax.f32 %v114, %v115
  %v117 = vrot.slane %v116, 1
  %v118 = vmax.f32 %v116, %v117
  %v119 = vsub.f32 %v65, %v118
  %v120 = vmul.f32 %v119, 1.442695
  %v121 = vpow.pop %v120
  %v122 = vsel %vm81, %v121, 0.0
  %v123 = vrot.slane %v122, 4
  %v124 = vadd.f32 %v122, %v123
  %v125 = vrot.slane %v124, 2
  %v126 = vadd.f32 %v124, %v125
  %v127 = vrot.slane %v126, 1
  %v128 = vadd.f32 %v126, %v127
  %v129 = vrcp.pop %v128
  %v130 = vmul.f32 %v128, %v129
  %v131 = vsub.f32 2.0, %v130
  %v132 = vmul.f32 %v129, %v131
  %133 = vst.msk [vmem:[%s3] sm:$0xff] %vm81, %v65
  %v134 = vmul.f32 %v121, %v132
  %135 = vst.msk [vmem:[%s4] sm:$0xff] %vm81, %v134
  // Predicated region
  $region14: #{simple_linear_classifier.1} parent=0 // pred_check
    _
  $region15: #{simple_linear_classifier.1} parent=0 // pred_check_branch
    %137 = sbr.rel (0) target = $region17
  $region16: #{simple_linear_classifier.1} parent=0 // pred_region
    _
  $region17: #{simple_linear_classifier.1} parent=0 // pred_fallthru
    _
  // Predicated region
  $region18: #{simple_linear_classifier.1} parent=0 // pred_check
    _
  $region19: #{simple_linear_classifier.1} parent=0 // pred_check_branch
    %139 = sbr.rel (0) target = $region21
  $region20: #{simple_linear_classifier.1} parent=0 // pred_region
    _
  $region21: #{simple_linear_classifier.1} parent=0 // pred_fallthru
    _
  // Predicated region
  $region22: #{simple_linear_classifier.1} parent=0 // pred_check
    _
  $region23: #{simple_linear_classifier.1} parent=0 // pred_check_branch
    %141 = sbr.rel (0) target = $region25
  $region24: #{simple_linear_classifier.1} parent=0 // pred_region
    _
  $region25: #{simple_linear_classifier.1} parent=0 // pred_fallthru
    _
  // Predicated region
  $region26: #{simple_linear_classifier.1} parent=0 // pred_check
    _
  $region27: #{simple_linear_classifier.1} parent=0 // pred_check_branch
    %143 = sbr.rel (0) target = $region29
  $region28: #{simple_linear_classifier.1} parent=0 // pred_region
    _
  $region29: #{simple_linear_classifier.1} parent=0 // pred_fallthru
    _

</llo_original>
